<compile_context>
chip_gen: v7x
topology: tpu7x:2x2x1
jax: 0.10.0
libtpu: 0.0.40
codegen_flags: <defaults>
</compile_context>

<pallas_src>
import jax
import jax.numpy as jnp
from jax import lax
from jax.experimental import pallas as pl
from jax.experimental.pallas import tpu as pltpu

EPS = 1e-5


def _round_up(x, m):
    return ((x + m - 1) // m) * m


def _choose_tile_k(in_dim, max_tile_k=1024):
    """K (in_dim) tile: keep the whole reduction resident when small, else a
    lane-aligned tile that (preferably) divides in_dim."""
    if in_dim <= max_tile_k:
        return in_dim
    for tk in (1024, 512, 256, 128):
        if in_dim % tk == 0:
            return tk
    return max_tile_k  # caller pads K to a multiple of this


def _block_spec(shape, index_map, buffers=None):
    """BlockSpec with an optional explicit buffer count, falling back to the
    default double-buffered spec if pipeline_mode isn't supported."""
    if buffers is not None and hasattr(pl, "Buffered"):
        try:
            return pl.BlockSpec(shape, index_map, pipeline_mode=pl.Buffered(buffers))
        except TypeError:
            pass
    return pl.BlockSpec(shape, index_map)


def _fc_bn_relu_kernel(x_ref, w_ref, gamma_ref, beta_ref, o_ref, acc_ref):
    k = pl.program_id(1)

    # ---- init accumulator on first K step ----
    @pl.when(k == 0)
    def _():
        acc_ref[...] = jnp.zeros_like(acc_ref)

    # ---- Linear: x (N, TK) @ W (TK, TN) -> f32 accumulate on the MXU ----
    acc_ref[...] += jnp.dot(
        x_ref[...], w_ref[...], preferred_element_type=jnp.float32
    )

    # ---- BN (two-pass centered variance) + affine + ReLU on last K step ----
    @pl.when(k == pl.num_programs(1) - 1)
    def _():
        y = acc_ref[...]                                      # (N, TN) f32
        inv_n = 1.0 / y.shape[0]
        mean = jnp.sum(y, axis=0, keepdims=True) * inv_n      # (1, TN)
        centered = y - mean
        var = jnp.sum(centered * centered, axis=0, keepdims=True) * inv_n
        scale = lax.rsqrt(var + EPS) * gamma_ref[...]         # gamma / sqrt(var+eps)
        z = centered * scale + beta_ref[...]
        o_ref[...] = jnp.maximum(z, 0.0).astype(o_ref.dtype)


def prepare_params(weight, gamma, beta, *, tile_n=256, max_tile_k=1024,
                   matmul_dtype=jnp.bfloat16):
    """One-time parameter setup (transpose / pad / cast) hoisted out of the
    per-call forward path.

    weight: (out_dim, in_dim)  PyTorch nn.Linear layout
    gamma, beta: (out_dim,)    BatchNorm affine parameters
    """
    out_dim, in_dim = weight.shape
    tile_n = min(tile_n, _round_up(out_dim, 128))   # lane-dense, MXU-wide
    out_pad = _round_up(out_dim, tile_n)
    tile_k = _choose_tile_k(in_dim, max_tile_k)
    in_pad = _round_up(in_dim, tile_k)

    w_t = weight.T                                   # (in_dim, out_dim), once
    w_t = jnp.pad(w_t, ((0, in_pad - in_dim), (0, out_pad - out_dim)))
    w_t = w_t.astype(matmul_dtype)

    g = jnp.pad(gamma.astype(jnp.float32), (0, out_pad - out_dim),
                constant_values=1.0).reshape(1, out_pad)
    b = jnp.pad(beta.astype(jnp.float32),
                (0, out_pad - out_dim)).reshape(1, out_pad)

    return dict(w_t=w_t, gamma=g, beta=b, in_dim=in_dim, out_dim=out_dim,
                tile_n=tile_n, tile_k=tile_k, matmul_dtype=matmul_dtype)


def fc_bn_relu(x, params, *, out_dtype=jnp.float32):
    """Forward pass of FCBNReLU (training-mode BatchNorm1d).

    x: (N, in_dim).  `params` comes from prepare_params().
    out_dtype: set to jnp.bfloat16 to halve output write traffic when the
               consumer accepts it; math stays f32 either way.
    """
    w_t, gamma, beta = params["w_t"], params["gamma"], params["beta"]
    in_dim, out_dim = params["in_dim"], params["out_dim"]
    tile_n, tile_k = params["tile_n"], params["tile_k"]
    mm_dtype = params["matmul_dtype"]

    n, x_in = x.shape
    assert x_in == in_dim, (x_in, in_dim)
    in_pad, out_pad = w_t.shape
    n_j = out_pad // tile_n
    n_k = in_pad // tile_k

    if x.dtype != mm_dtype:
        x = x.astype(mm_dtype)
    if in_pad != in_dim:
        # Only triggers in the tiled-K (very large in_dim) path; zero pad
        # columns meet zero-padded W rows, contributing nothing.
        x = jnp.pad(x, ((0, 0), (0, in_pad - in_dim)))

    x_grid_invariant = (n_k == 1)
    w_buffers = 3 if (n <= 256 and n_j * n_k >= 3) else None

    # ---- buffer-accurate, generation-aware VMEM budget ----
    x_elem = jnp.dtype(mm_dtype).itemsize
    out_elem = jnp.dtype(out_dtype).itemsize
    x_bufs = 1 if x_grid_invariant else 2
    w_bufs = w_buffers if w_buffers is not None else 2
    footprint = (x_bufs * n * tile_k * x_elem
                 + w_bufs * tile_k * tile_n * x_elem
                 + 2 * n * tile_n * out_elem          # double-buffered out tile
                 + n * tile_n * 4                     # f32 accumulator scratch
                 + 2 * 2 * tile_n * 4)                # gamma/beta slabs
    try:
        cap = pltpu.get_tpu_info().vmem_capacity_bytes
    except Exception:
        cap = 64 * 1024 * 1024                        # conservative (v7x) fallback
    vmem_limit = max(8 << 20, min(int(footprint * 1.25) + (1 << 20),
                                  int(cap * 0.9)))

    def build_call(use_buffer_hints):
        x_spec = _block_spec(
            (n, tile_k), lambda j, k: (0, k),
            buffers=(1 if (use_buffer_hints and x_grid_invariant) else None))
        w_spec = _block_spec(
            (tile_k, tile_n), lambda j, k: (k, j),
            buffers=(w_buffers if use_buffer_hints else None))
        g_spec = pl.BlockSpec((1, tile_n), lambda j, k: (0, j))
        b_spec = pl.BlockSpec((1, tile_n), lambda j, k: (0, j))
        o_spec = pl.BlockSpec((n, tile_n), lambda j, k: (0, j))
        return pl.pallas_call(
            _fc_bn_relu_kernel,
            out_shape=jax.ShapeDtypeStruct((n, out_pad), out_dtype),
            grid=(n_j, n_k),
            in_specs=[x_spec, w_spec, g_spec, b_spec],
            out_specs=o_spec,
            scratch_shapes=[pltpu.VMEM((n, tile_n), jnp.float32)],
            compiler_params=pltpu.CompilerParams(
                dimension_semantics=("parallel", "arbitrary"),
                vmem_limit_bytes=vmem_limit,
            ),
        )

    try:
        out = build_call(True)(x, w_t, gamma, beta)
    except Exception:
        # Fallback if this jax/Mosaic build rejects explicit buffer counts.
        out = build_call(False)(x, w_t, gamma, beta)

    return out[:, :out_dim]


def reference(x, weight, bias, gamma, beta):
    y = x @ weight.T + bias
    mean = y.mean(axis=0, keepdims=True)
    var = ((y - mean) ** 2).mean(axis=0, keepdims=True)   # biased, like PyTorch BN
    z = (y - mean) / jnp.sqrt(var + EPS) * gamma + beta
    return jnp.maximum(z, 0.0)


if __name__ == "__main__":
    key = jax.random.PRNGKey(0)
    n, in_dim, out_dim = 8, 32, 64

    k_x, k_w, k_b, k_g, k_be = jax.random.split(key, 5)
    x = jax.random.normal(k_x, (n, in_dim), dtype=jnp.float32)
    weight = jax.random.normal(k_w, (out_dim, in_dim), dtype=jnp.float32) * (
        1.0 / jnp.sqrt(in_dim))
    bias = 0.1 * jax.random.normal(k_b, (out_dim,), dtype=jnp.float32)
    gamma = 1.0 + 0.1 * jax.random.normal(k_g, (out_dim,), dtype=jnp.float32)
    beta = 0.1 * jax.random.normal(k_be, (out_dim,), dtype=jnp.float32)

    # --- exact-numerics path (f32 matmul) against the PyTorch-equivalent ref ---
    params_f32 = prepare_params(weight, gamma, beta, matmul_dtype=jnp.float32)
    out_f32 = jax.block_until_ready(fc_bn_relu(x, params_f32))
    ref_f32 = reference(x, weight, bias, gamma, beta)
    assert out_f32.shape == (n, out_dim)
    err_f32 = float(jnp.abs(out_f32 - ref_f32).max())
    assert jnp.allclose(out_f32, ref_f32, atol=2e-4, rtol=2e-4), err_f32

    # --- default path (bf16 matmul, f32 epilogue); compare against the ref
    #     evaluated on bf16-rounded operands (MXU accumulates in f32) ---
    params_bf16 = prepare_params(weight, gamma, beta)   # bf16 default
    out_bf16 = jax.block_until_ready(fc_bn_relu(x, params_bf16))
    ref_bf16 = reference(x.astype(jnp.bfloat16).astype(jnp.float32),
                         weight.astype(jnp.bfloat16).astype(jnp.float32),
                         bias, gamma, beta)
    err_bf16 = float(jnp.abs(out_bf16 - ref_bf16).max())
    assert jnp.allclose(out_bf16, ref_bf16, atol=1e-2, rtol=1e-2), err_bf16

    print("KERNEL_OK")
</pallas_src>

<mosaic_0001>
module attributes {stable_mosaic.version = 11 : i64} {
  func.func @_fc_bn_relu_kernel(%arg0: i32, %arg1: i32, %arg2: memref<8x32xf32, #tpu.memory_space<vmem>>, %arg3: memref<32x128xf32, #tpu.memory_space<vmem>>, %arg4: memref<1x128xf32, #tpu.memory_space<vmem>>, %arg5: memref<1x128xf32, #tpu.memory_space<vmem>>, %arg6: memref<8x128xf32, #tpu.memory_space<vmem>>, %arg7: memref<8x128xf32, #tpu.memory_space<vmem>>) attributes {dimension_semantics = [#tpu.dimension_semantics<parallel>, #tpu.dimension_semantics<arbitrary>], iteration_bounds = array<i64: 1, 1>, scalar_prefetch = 0 : i64, scratch_operands = 1 : i64, tpu.core_type = #tpu.core_type<tc>, window_params = [{pipeline_mode = #tpu.pipeline_mode<synchronous>, transform_indices = @transform_0, window_bounds = array<i64: 8, 32>}, {transform_indices = @transform_1, window_bounds = array<i64: 32, 128>}, {transform_indices = @transform_2, window_bounds = array<i64: 1, 128>}, {transform_indices = @transform_3, window_bounds = array<i64: 1, 128>}, {transform_indices = @transform_4, window_bounds = array<i64: 8, 128>}]} {
    %c0_i32 = arith.constant 0 : i32
    %0 = arith.cmpi eq, %arg1, %c0_i32 : i32
    %1 = arith.extui %0 : i1 to i32
    %c0_i32_0 = arith.constant 0 : i32
    %2 = arith.cmpi ne, %1, %c0_i32_0 : i32
    scf.if %2 {
      %cst_10 = arith.constant 0.000000e+00 : f32
      %12 = vector.broadcast %cst_10 : f32 to vector<8x128xf32>
      %c0_11 = arith.constant 0 : index
      %c0_12 = arith.constant 0 : index
      %13 = vector.load %arg7[%c0_11, %c0_12] : memref<8x128xf32, #tpu.memory_space<vmem>>, vector<8x128xf32>
      tpu.vector_store %arg7[%c0_11, %c0_12], %12 {strides = array<i32>} : memref<8x128xf32, #tpu.memory_space<vmem>>, vector<8x128xf32>,
    } else {
    }
    %c0 = arith.constant 0 : index
    %c0_1 = arith.constant 0 : index
    %3 = vector.load %arg7[%c0, %c0_1] : memref<8x128xf32, #tpu.memory_space<vmem>>, vector<8x128xf32>
    %c0_2 = arith.constant 0 : index
    %c0_3 = arith.constant 0 : index
    %4 = vector.load %arg2[%c0_2, %c0_3] : memref<8x32xf32, #tpu.memory_space<vmem>>, vector<8x32xf32>
    %c0_4 = arith.constant 0 : index
    %c0_5 = arith.constant 0 : index
    %5 = vector.load %arg3[%c0_4, %c0_5] : memref<32x128xf32, #tpu.memory_space<vmem>>, vector<32x128xf32>
    %cst = arith.constant dense<0.000000e+00> : vector<8x128xf32>
    %6 = tpu.matmul %4, %5, %cst {dimension_numbers = #tpu.dot_dimension_numbers<[1], [0], [0], [1], [0, 0, 1, 1], [], []>} : vector<8x32xf32>, vector<32x128xf32>, vector<8x128xf32> -> vector<8x128xf32>
    %7 = arith.addf %3, %6 : vector<8x128xf32>
    %c0_6 = arith.constant 0 : index
    %c0_7 = arith.constant 0 : index
    %8 = vector.load %arg7[%c0_6, %c0_7] : memref<8x128xf32, #tpu.memory_space<vmem>>, vector<8x128xf32>
    tpu.vector_store %arg7[%c0_6, %c0_7], %7 {strides = array<i32>} : memref<8x128xf32, #tpu.memory_space<vmem>>, vector<8x128xf32>,
    %c0_i32_8 = arith.constant 0 : i32
    %9 = arith.cmpi eq, %arg1, %c0_i32_8 : i32
    %10 = arith.extui %9 : i1 to i32
    %c0_i32_9 = arith.constant 0 : i32
    %11 = arith.cmpi ne, %10, %c0_i32_9 : i32
    scf.if %11 {
      %c0_10 = arith.constant 0 : index
      %c0_11 = arith.constant 0 : index
      %12 = vector.load %arg7[%c0_10, %c0_11] : memref<8x128xf32, #tpu.memory_space<vmem>>, vector<8x128xf32>
      %cst_12 = arith.constant dense<0.000000e+00> : vector<128xf32>
      %13 = vector.multi_reduction <add>, %12, %cst_12 [0] : vector<8x128xf32> to vector<128xf32>
      %14 = vector.shape_cast %13 : vector<128xf32> to vector<1x128xf32>
      %cst_13 = arith.constant 1.250000e-01 : f32
      %15 = vector.broadcast %cst_13 : f32 to vector<1x128xf32>
      %16 = arith.mulf %14, %15 : vector<1x128xf32>
      %17 = vector.broadcast %16 : vector<1x128xf32> to vector<8x128xf32>
      %18 = arith.subf %12, %17 : vector<8x128xf32>
      %19 = arith.mulf %18, %18 : vector<8x128xf32>
      %cst_14 = arith.constant dense<0.000000e+00> : vector<128xf32>
      %20 = vector.multi_reduction <add>, %19, %cst_14 [0] : vector<8x128xf32> to vector<128xf32>
      %21 = vector.shape_cast %20 : vector<128xf32> to vector<1x128xf32>
      %cst_15 = arith.constant 1.250000e-01 : f32
      %22 = vector.broadcast %cst_15 : f32 to vector<1x128xf32>
      %23 = arith.mulf %21, %22 : vector<1x128xf32>
      %cst_16 = arith.constant 9.99999974E-6 : f32
      %24 = vector.broadcast %cst_16 : f32 to vector<1x128xf32>
      %25 = arith.addf %23, %24 : vector<1x128xf32>
      %26 = math.rsqrt %25 : vector<1x128xf32>
      %c0_17 = arith.constant 0 : index
      %c0_18 = arith.constant 0 : index
      %27 = vector.load %arg4[%c0_17, %c0_18] : memref<1x128xf32, #tpu.memory_space<vmem>>, vector<1x128xf32>
      %28 = arith.mulf %26, %27 : vector<1x128xf32>
      %29 = vector.broadcast %28 : vector<1x128xf32> to vector<8x128xf32>
      %30 = arith.mulf %18, %29 : vector<8x128xf32>
      %c0_19 = arith.constant 0 : index
      %c0_20 = arith.constant 0 : index
      %31 = vector.load %arg5[%c0_19, %c0_20] : memref<1x128xf32, #tpu.memory_space<vmem>>, vector<1x128xf32>
      %32 = vector.broadcast %31 : vector<1x128xf32> to vector<8x128xf32>
      %33 = arith.addf %30, %32 : vector<8x128xf32>
      %cst_21 = arith.constant 0.000000e+00 : f32
      %34 = vector.broadcast %cst_21 : f32 to vector<8x128xf32>
      %35 = arith.maximumf %33, %34 : vector<8x128xf32>
      %c0_22 = arith.constant 0 : index
      %c0_23 = arith.constant 0 : index
      %36 = vector.load %arg6[%c0_22, %c0_23] : memref<8x128xf32, #tpu.memory_space<vmem>>, vector<8x128xf32>
      tpu.vector_store %arg6[%c0_22, %c0_23], %35 {strides = array<i32>} : memref<8x128xf32, #tpu.memory_space<vmem>>, vector<8x128xf32>,
    } else {
    }
    return
  }
  func.func @transform_0(%arg0: i32, %arg1: i32) -> (i32, i32) {
    %c0_i32 = arith.constant 0 : i32
    %c0_i32_0 = arith.constant 0 : i32
    return %c0_i32, %arg1 : i32, i32
  }
  func.func @transform_1(%arg0: i32, %arg1: i32) -> (i32, i32) {
    %c0_i32 = arith.constant 0 : i32
    return %arg1, %arg0 : i32, i32
  }
  func.func @transform_2(%arg0: i32, %arg1: i32) -> (i32, i32) {
    %c0_i32 = arith.constant 0 : i32
    %c0_i32_0 = arith.constant 0 : i32
    return %c0_i32, %arg0 : i32, i32
  }
  func.func @transform_3(%arg0: i32, %arg1: i32) -> (i32, i32) {
    %c0_i32 = arith.constant 0 : i32
    %c0_i32_0 = arith.constant 0 : i32
    return %c0_i32, %arg0 : i32, i32
  }
  func.func @transform_4(%arg0: i32, %arg1: i32) -> (i32, i32) {
    %c0_i32 = arith.constant 0 : i32
    %c0_i32_0 = arith.constant 0 : i32
    return %c0_i32, %arg0 : i32, i32
  }
}

module attributes {stable_mosaic.version = 11 : i64} {
  func.func @_fc_bn_relu_kernel(%arg0: i32, %arg1: i32, %arg2: memref<8x32xf32, #tpu.memory_space<vmem>>, %arg3: memref<32x128xf32, #tpu.memory_space<vmem>>, %arg4: memref<1x128xf32, #tpu.memory_space<vmem>>, %arg5: memref<1x128xf32, #tpu.memory_space<vmem>>, %arg6: memref<8x128xf32, #tpu.memory_space<vmem>>, %arg7: memref<8x128xf32, #tpu.memory_space<vmem>>) attributes {dimension_semantics = [#tpu.dimension_semantics<parallel>, #tpu.dimension_semantics<arbitrary>], iteration_bounds = array<i64: 1, 1>, scalar_prefetch = 0 : i64, scratch_operands = 1 : i64, tpu.core_type = #tpu.core_type<tc>, window_params = [{transform_indices = @transform_0, window_bounds = array<i64: 8, 32>}, {transform_indices = @transform_1, window_bounds = array<i64: 32, 128>}, {transform_indices = @transform_2, window_bounds = array<i64: 1, 128>}, {transform_indices = @transform_3, window_bounds = array<i64: 1, 128>}, {transform_indices = @transform_4, window_bounds = array<i64: 8, 128>}]} {
    %c0_i32 = arith.constant 0 : i32
    %0 = arith.cmpi eq, %arg1, %c0_i32 : i32
    %1 = arith.extui %0 : i1 to i32
    %c0_i32_0 = arith.constant 0 : i32
    %2 = arith.cmpi ne, %1, %c0_i32_0 : i32
    scf.if %2 {
      %cst_10 = arith.constant 0.000000e+00 : f32
      %12 = vector.broadcast %cst_10 : f32 to vector<8x128xf32>
      %c0_11 = arith.constant 0 : index
      %c0_12 = arith.constant 0 : index
      %13 = vector.load %arg7[%c0_11, %c0_12] : memref<8x128xf32, #tpu.memory_space<vmem>>, vector<8x128xf32>
      tpu.vector_store %arg7[%c0_11, %c0_12], %12 {strides = array<i32>} : memref<8x128xf32, #tpu.memory_space<vmem>>, vector<8x128xf32>,
    } else {
    }
    %c0 = arith.constant 0 : index
    %c0_1 = arith.constant 0 : index
    %3 = vector.load %arg7[%c0, %c0_1] : memref<8x128xf32, #tpu.memory_space<vmem>>, vector<8x128xf32>
    %c0_2 = arith.constant 0 : index
    %c0_3 = arith.constant 0 : index
    %4 = vector.load %arg2[%c0_2, %c0_3] : memref<8x32xf32, #tpu.memory_space<vmem>>, vector<8x32xf32>
    %c0_4 = arith.constant 0 : index
    %c0_5 = arith.constant 0 : index
    %5 = vector.load %arg3[%c0_4, %c0_5] : memref<32x128xf32, #tpu.memory_space<vmem>>, vector<32x128xf32>
    %cst = arith.constant dense<0.000000e+00> : vector<8x128xf32>
    %6 = tpu.matmul %4, %5, %cst {dimension_numbers = #tpu.dot_dimension_numbers<[1], [0], [0], [1], [0, 0, 1, 1], [], []>} : vector<8x32xf32>, vector<32x128xf32>, vector<8x128xf32> -> vector<8x128xf32>
    %7 = arith.addf %3, %6 : vector<8x128xf32>
    %c0_6 = arith.constant 0 : index
    %c0_7 = arith.constant 0 : index
    %8 = vector.load %arg7[%c0_6, %c0_7] : memref<8x128xf32, #tpu.memory_space<vmem>>, vector<8x128xf32>
    tpu.vector_store %arg7[%c0_6, %c0_7], %7 {strides = array<i32>} : memref<8x128xf32, #tpu.memory_space<vmem>>, vector<8x128xf32>,
    %c0_i32_8 = arith.constant 0 : i32
    %9 = arith.cmpi eq, %arg1, %c0_i32_8 : i32
    %10 = arith.extui %9 : i1 to i32
    %c0_i32_9 = arith.constant 0 : i32
    %11 = arith.cmpi ne, %10, %c0_i32_9 : i32
    scf.if %11 {
      %c0_10 = arith.constant 0 : index
      %c0_11 = arith.constant 0 : index
      %12 = vector.load %arg7[%c0_10, %c0_11] : memref<8x128xf32, #tpu.memory_space<vmem>>, vector<8x128xf32>
      %cst_12 = arith.constant dense<0.000000e+00> : vector<128xf32>
      %13 = vector.multi_reduction <add>, %12, %cst_12 [0] : vector<8x128xf32> to vector<128xf32>
      %14 = vector.shape_cast %13 : vector<128xf32> to vector<1x128xf32>
      %cst_13 = arith.constant 1.250000e-01 : f32
      %15 = vector.broadcast %cst_13 : f32 to vector<1x128xf32>
      %16 = arith.mulf %14, %15 : vector<1x128xf32>
      %17 = vector.broadcast %16 : vector<1x128xf32> to vector<8x128xf32>
      %18 = arith.subf %12, %17 : vector<8x128xf32>
      %19 = arith.mulf %18, %18 : vector<8x128xf32>
      %cst_14 = arith.constant dense<0.000000e+00> : vector<128xf32>
      %20 = vector.multi_reduction <add>, %19, %cst_14 [0] : vector<8x128xf32> to vector<128xf32>
      %21 = vector.shape_cast %20 : vector<128xf32> to vector<1x128xf32>
      %cst_15 = arith.constant 1.250000e-01 : f32
      %22 = vector.broadcast %cst_15 : f32 to vector<1x128xf32>
      %23 = arith.mulf %21, %22 : vector<1x128xf32>
      %cst_16 = arith.constant 9.99999974E-6 : f32
      %24 = vector.broadcast %cst_16 : f32 to vector<1x128xf32>
      %25 = arith.addf %23, %24 : vector<1x128xf32>
      %26 = math.rsqrt %25 : vector<1x128xf32>
      %c0_17 = arith.constant 0 : index
      %c0_18 = arith.constant 0 : index
      %27 = vector.load %arg4[%c0_17, %c0_18] : memref<1x128xf32, #tpu.memory_space<vmem>>, vector<1x128xf32>
      %28 = arith.mulf %26, %27 : vector<1x128xf32>
      %29 = vector.broadcast %28 : vector<1x128xf32> to vector<8x128xf32>
      %30 = arith.mulf %18, %29 : vector<8x128xf32>
      %c0_19 = arith.constant 0 : index
      %c0_20 = arith.constant 0 : index
      %31 = vector.load %arg5[%c0_19, %c0_20] : memref<1x128xf32, #tpu.memory_space<vmem>>, vector<1x128xf32>
      %32 = vector.broadcast %31 : vector<1x128xf32> to vector<8x128xf32>
      %33 = arith.addf %30, %32 : vector<8x128xf32>
      %cst_21 = arith.constant 0.000000e+00 : f32
      %34 = vector.broadcast %cst_21 : f32 to vector<8x128xf32>
      %35 = arith.maximumf %33, %34 : vector<8x128xf32>
      %c0_22 = arith.constant 0 : index
      %c0_23 = arith.constant 0 : index
      %36 = vector.load %arg6[%c0_22, %c0_23] : memref<8x128xf32, #tpu.memory_space<vmem>>, vector<8x128xf32>
      tpu.vector_store %arg6[%c0_22, %c0_23], %35 {strides = array<i32>} : memref<8x128xf32, #tpu.memory_space<vmem>>, vector<8x128xf32>,
    } else {
    }
    return
  }
  func.func @transform_0(%arg0: i32, %arg1: i32) -> (i32, i32) {
    %c0_i32 = arith.constant 0 : i32
    %c0_i32_0 = arith.constant 0 : i32
    return %c0_i32, %arg1 : i32, i32
  }
  func.func @transform_1(%arg0: i32, %arg1: i32) -> (i32, i32) {
    %c0_i32 = arith.constant 0 : i32
    return %arg1, %arg0 : i32, i32
  }
  func.func @transform_2(%arg0: i32, %arg1: i32) -> (i32, i32) {
    %c0_i32 = arith.constant 0 : i32
    %c0_i32_0 = arith.constant 0 : i32
    return %c0_i32, %arg0 : i32, i32
  }
  func.func @transform_3(%arg0: i32, %arg1: i32) -> (i32, i32) {
    %c0_i32 = arith.constant 0 : i32
    %c0_i32_0 = arith.constant 0 : i32
    return %c0_i32, %arg0 : i32, i32
  }
  func.func @transform_4(%arg0: i32, %arg1: i32) -> (i32, i32) {
    %c0_i32 = arith.constant 0 : i32
    %c0_i32_0 = arith.constant 0 : i32
    return %c0_i32, %arg0 : i32, i32
  }
}

</mosaic_0001>

<llo_original>
// kernel: tpu_custom_call.1
$region0: #{tpu_custom_call.1}
  #allocation0 [shape = 'u32[]', space=smem, size = 0x4, offset = 0x4, fixed_abs, tag = 'smem constant byte address 0x4 - core index']
  #allocation1 [shape = 'u32[144,128]{1,0:T(1,128)}', space=vmem, size = 0x12000, scoped, tag = 'internal scratch']
  #allocation2 [shape = 'f32[8,128]{1,0:T(8,128)}', space=vmem, size = 0x1000, scoped, tag = 'scratch operand']
  %s0 = inlined_call_operand.hbm [shape: f32[8,32], index: 0, kind: input, shape index: {}]
  %s1 = inlined_call_operand.hbm [shape: f32[32,128], index: 1, kind: input, shape index: {}]
  %s2 = inlined_call_operand.vmem [shape: f32[1,128], index: 2, kind: input, shape index: {}]
  %s3 = inlined_call_operand.vmem [shape: f32[1,128], index: 3, kind: input, shape index: {}]
  %s4 = inlined_call_operand.hbm [shape: f32[8,128], index: 4, kind: output, shape index: {}]
  %s5 = sld [smem:[#allocation0]]
  $region42: #{tpu_custom_call.1} parent=0
    _
  %s7 = ssub.s32 1, %s5
  %s8 = scalar_select 0, %s7, %s5
  $region1: #{tpu_custom_call.1} parent=0
    #allocation3 [shape = 'u8[4096]{0}', space=vmem, size = 0x1000, scoped, tag = 'input window, operand 0, single buffered']
    #allocation4 [shape = 's32[1]{0}', space=sflag, size = 0x4, scoped, tag = 'scoped memory for tpu_custom_call.1']
    #allocation5 [shape = 's32[1]{0}', space=sflag, size = 0x4, scoped, tag = 'scoped memory for tpu_custom_call.1']
    #allocation6 [shape = 'u8[16384]{0}', space=vmem, size = 0x4000, scoped, tag = 'input window, operand 1, single buffered']
    #allocation7 [shape = 's32[1]{0}', space=sflag, size = 0x4, scoped, tag = 'scoped memory for tpu_custom_call.1']
    #allocation8 [shape = 'u8[4096]{0}', space=vmem, size = 0x1000, scoped, tag = 'output window, operand 0, single buffered']
    %9 = vsyncpa [#allocation4], 0
    %10 = vsyncpa [#allocation7], 0
    %11 = vsyncpa [#allocation5], 0
    // Predicated region
    $region2: #{tpu_custom_call.1} parent=1 // pred_check
      _
    $region3: #{tpu_custom_call.1} parent=1 // pred_check_branch
      %13 = sbr.rel (0) target = $region5
    $region4: #{tpu_custom_call.1} parent=1 // pred_region
      %s15 = ssub.s32 128, 128
      %16 = vsyncadd [#allocation4], %s15
      %s18 = sshll.u32 [#allocation3], 4
      %s19 = int_to_ptr.vmem [resolvable:$true] %s18
      %21 = dma.hbm_to_vmem [thread:$0]  %s0, 128, %s19, [#allocation4]
    $region5: #{tpu_custom_call.1} parent=1 // pred_fallthru
      _
    // Predicated region
    $region6: #{tpu_custom_call.1} parent=1 // pred_check
      _
    $region7: #{tpu_custom_call.1} parent=1 // pred_check_branch
      %23 = sbr.rel (0) target = $region9
    $region8: #{tpu_custom_call.1} parent=1 // pred_region
      %s25 = ssub.s32 512, 512
      %26 = vsyncadd [#allocation7], %s25
      %s27 = sshll.u32 [#allocation6], 4
      %s28 = int_to_ptr.vmem [resolvable:$true] %s27
      %33 = dma.hbm_to_vmem [thread:$0]  %s1, 512, %s28, [#allocation7], 128, 128, 8
    $region9: #{tpu_custom_call.1} parent=1 // pred_fallthru
      _
    // Predicated region
    $region10: #{tpu_custom_call.1} parent=1 // pred_check
      _
    $region11: #{tpu_custom_call.1} parent=1 // pred_check_branch
      %35 = sbr.rel (0) target = $region13
    $region12: #{tpu_custom_call.1} parent=1 // pred_region
      _
    $region13: #{tpu_custom_call.1} parent=1 // pred_fallthru
      _
    // Predicated region
    $region14: #{tpu_custom_call.1} parent=1 // pred_check
      _
    $region15: #{tpu_custom_call.1} parent=1 // pred_check_branch
      %37 = sbr.rel (0) target = $region17
    $region16: #{tpu_custom_call.1} parent=1 // pred_region
      _
    $region17: #{tpu_custom_call.1} parent=1 // pred_fallthru
      _
    // Predicated region
    $region18: #{tpu_custom_call.1} parent=1 // pred_check
      _
    $region19: #{tpu_custom_call.1} parent=1 // pred_check_branch
      %39 = sbr.rel (0) target = $region21
    $region20: #{tpu_custom_call.1} parent=1 // pred_region
      %40 = dma.done [#allocation4], 128
    $region21: #{tpu_custom_call.1} parent=1 // pred_fallthru
      _
    // Predicated region
    $region22: #{tpu_custom_call.1} parent=1 // pred_check
      _
    $region23: #{tpu_custom_call.1} parent=1 // pred_check_branch
      %42 = sbr.rel (0) target = $region25
    $region24: #{tpu_custom_call.1} parent=1 // pred_region
      %43 = dma.done [#allocation7], 512
    $region25: #{tpu_custom_call.1} parent=1 // pred_fallthru
      _
    %p44 = scmp.eq.s32.totalorder 0, 0
    // Predicated region
    $region26: #{tpu_custom_call.1} parent=1 // pred_check
      %p45 = pneg %p44
    $region27: #{tpu_custom_call.1} parent=1 // pred_check_branch
      %47 = sbr.rel (%p45) target = $region29
    $region28: #{tpu_custom_call.1} parent=1 // pred_region
      %48 = vst [vmem:[#allocation2] sm:$0xff] 0.0
    $region29: #{tpu_custom_call.1} parent=1 // pred_fallthru
      _
    %v49 = vld [vmem:[#allocation2] sm:$0xff]
    %v50 = vld [vmem:[#allocation3] sm:$0xff]
    %v51 = vld [vmem:[#allocation6] sm:$0xff]
    %v52 = vld [vmem:[#allocation6 + $0x8] sm:$0xff]
    %v53 = vld [vmem:[#allocation6 + $0x10] sm:$0xff]
    %v54 = vld [vmem:[#allocation6 + $0x18] sm:$0xff]
    %vm55 = vcmask 261120
    %v57 = vsel %vm55, %v50, 0
    %59 = vmatprep.subr.mxu0 0.0
    %60 = vmatpush1.msra.mxu0 %v51
    %61 = vmatprep.subr.mxu0 0.0
    %62 = vmatpush1.msra.mxu0 %v52
    %63 = vmatprep.subr.mxu0 0.0
    %64 = vmatpush1.msra.mxu0 %v53
    %65 = vmatprep.subr.mxu0 0.0
    %66 = vmatpush1.msra.mxu0 %v54
    %67 = vmatprep.subr.mxu0 0.0
    %68 = vmatpush1.msra.mxu0 0.0
    %69 = vmatprep.subr.mxu0 0.0
    %70 = vmatpush1.msra.mxu0 0.0
    %71 = vmatprep.subr.mxu0 0.0
    %72 = vmatpush1.msra.mxu0 0.0
    %73 = vmatprep.subr.mxu0 0.0
    %74 = vmatpush1.msra.mxu0 0.0
    %75 = vmatprep.subr.mxu0 0.0
    %76 = vmatpush1.msra.mxu0 0.0
    %77 = vmatprep.subr.mxu0 0.0
    %78 = vmatpush1.msra.mxu0 0.0
    %79 = vmatprep.subr.mxu0 0.0
    %80 = vmatpush1.msra.mxu0 0.0
    %81 = vmatprep.subr.mxu0 0.0
    %82 = vmatpush1.msra.mxu0 0.0
    %83 = vmatprep.subr.mxu0 0.0
    %84 = vmatpush1.msra.mxu0 0.0
    %85 = vmatprep.subr.mxu0 0.0
    %86 = vmatpush1.msra.mxu0 0.0
    %87 = vmatprep.subr.mxu0 0.0
    %88 = vmatpush1.msra.mxu0 0.0
    %89 = vmatprep.subr.mxu0 0.0
    %90 = vmatpush1.msra.mxu0 0.0
    %91 = vmatprep.subr.mxu0 0.0
    %92 = vmatpush1.msra.mxu0 0.0
    %93 = vmatprep.subr.mxu0 0.0
    %94 = vmatpush1.msra.mxu0 0.0
    %95 = vmatprep.subr.mxu0 0.0
    %96 = vmatpush1.msra.mxu0 0.0
    %97 = vmatprep.subr.mxu0 0.0
    %98 = vmatpush1.msra.mxu0 0.0
    %99 = vmatprep.subr.mxu0 0.0
    %100 = vmatpush1.msra.mxu0 0.0
    %101 = vmatprep.subr.mxu0 0.0
    %102 = vmatpush1.msra.mxu0 0.0
    %103 = vmatprep.subr.mxu0 0.0
    %104 = vmatpush1.msra.mxu0 0.0
    %105 = vmatprep.subr.mxu0 0.0
    %106 = vmatpush1.msra.mxu0 0.0
    %107 = vmatprep.subr.mxu0 0.0
    %108 = vmatpush1.msra.mxu0 0.0
    %109 = vmatprep.subr.mxu0 0.0
    %110 = vmatpush1.msra.mxu0 0.0
    %111 = vmatprep.subr.mxu0 0.0
    %112 = vmatpush1.msra.mxu0 0.0
    %113 = vmatprep.subr.mxu0 0.0
    %114 = vmatpush1.msra.mxu0 0.0
    %115 = vmatprep.subr.mxu0 0.0
    %116 = vmatpush1.msra.mxu0 0.0
    %117 = vmatprep.subr.mxu0 0.0
    %118 = vmatpush1.msra.mxu0 0.0
    %119 = vmatprep.subr.mxu0 0.0
    %120 = vmatpush1.msra.mxu0 0.0
    %121 = vmatprep.subr.mxu0 0.0
    %122 = vmatpush1.msra.mxu0 0.0
    %123 = vmatprep.mubr.f32.mxu0 0.0
    %124 = vmatmul.mubr.f32.gmra.mrb[0].mxu0 %v57
    %v125 = vpop.f32.mrb[0].mxu0
    %v126 = vadd.f32 0.0, %v125
    %v127 = vpop.f32.mrb[0].mxu0
    %128 = vdwg.mxu0
    %v129 = vadd.f32 %v49, %v126
    %130 = vst [vmem:[#allocation2] sm:$0xff] %v129
    // Predicated region
    $region30: #{tpu_custom_call.1} parent=1 // pred_check
      %p131 = pneg %p44
    $region31: #{tpu_custom_call.1} parent=1 // pred_check_branch
      %133 = sbr.rel (%p131) target = $region33
    $region32: #{tpu_custom_call.1} parent=1 // pred_region
      %v134 = vld [vmem:[#allocation2] sm:$0xff]
      %v135 = vrot.slane %v134, 4
      %v136 = vadd.f32 %v134, %v135
      %v137 = vrot.slane %v136, 2
      %v138 = vadd.f32 %v136, %v137
      %v139 = vrot.slane %v138, 1
      %v140 = vadd.f32 %v138, %v139
      %v141 = vmul.f32 %v140, 0.125
      %v142 = vsub.f32 %v134, %v141
      %v143 = vmul.f32 %v142, %v142
      %v144 = vrot.slane %v143, 4
      %v145 = vadd.f32 %v143, %v144
      %v146 = vrot.slane %v145, 2
      %v147 = vadd.f32 %v145, %v146
      %v148 = vrot.slane %v147, 1
      %v149 = vadd.f32 %v147, %v148
      %v150 = vmul.f32 %v149, 0.125
      %v151 = vadd.f32 %v150, 1e-05
      %v152 = vrsqrt.pop %v151
      %v153 = vld [vmem:[%s2] sm:$0x1]
      %v154 = vmul.f32 %v152, %v153
      %v155 = vlaneseq
      %v156 = vshrl.u32 %v155, 7
      %v157 = vsub.s32 0, %v156
      %v158 = vrot.slane %v154, %v157
      %v159 = vmul.f32 %v142, %v158
      %v160 = vld [vmem:[%s3] sm:$0x1]
      %v162 = vlaneseq
      %v163 = vshrl.u32 %v162, 7
      %v164 = vsub.s32 0, %v163
      %v165 = vrot.slane %v160, %v164
      %v167 = vadd.f32 %v159, %v165
      %v168 = vmax.f32 %v167, 0.0
      %169 = vst [vmem:[#allocation8] sm:$0xff] %v168
    $region33: #{tpu_custom_call.1} parent=1 // pred_fallthru
      _
    // Predicated region
    $region34: #{tpu_custom_call.1} parent=1 // pred_check
      _
    $region35: #{tpu_custom_call.1} parent=1 // pred_check_branch
      %171 = sbr.rel (0) target = $region37
    $region36: #{tpu_custom_call.1} parent=1 // pred_region
      %s173 = ssub.s32 128, 128
      %174 = vsyncadd [#allocation5], %s173
      %s176 = sshll.u32 [#allocation8], 4
      %s177 = int_to_ptr.vmem [resolvable:$true] %s176
      %179 = dma.vmem_to_hbm [thread:$0]  %s177, 128, %s4, [#allocation5]
    $region37: #{tpu_custom_call.1} parent=1 // pred_fallthru
      _
    // Predicated region
    $region38: #{tpu_custom_call.1} parent=1 // pred_check
      _
    $region39: #{tpu_custom_call.1} parent=1 // pred_check_branch
      %181 = sbr.rel (0) target = $region41
    $region40: #{tpu_custom_call.1} parent=1 // pred_region
      %182 = dma.done [#allocation5], 128
    $region41: #{tpu_custom_call.1} parent=1 // pred_fallthru
      _
    %183 = vsyncpa [#allocation4], 1
    %184 = vsyncpa [#allocation7], 1
    %185 = vsyncpa [#allocation5], 1

// kernel: tpu_custom_call.1
$region0: #{tpu_custom_call.1}
  #allocation0 [shape = 'u32[]', space=smem, size = 0x4, offset = 0x4, fixed_abs, tag = 'smem constant byte address 0x4 - core index']
  #allocation1 [shape = 'u32[144,128]{1,0:T(1,128)}', space=vmem, size = 0x12000, scoped, tag = 'internal scratch']
  #allocation2 [shape = 'f32[8,128]{1,0:T(8,128)}', space=vmem, size = 0x1000, scoped, tag = 'scratch operand']
  %s0 = inlined_call_operand.hbm [shape: f32[8,32], index: 0, kind: input, shape index: {}]
  %s1 = inlined_call_operand.hbm [shape: f32[32,128], index: 1, kind: input, shape index: {}]
  %s2 = inlined_call_operand.vmem [shape: f32[1,128], index: 2, kind: input, shape index: {}]
  %s3 = inlined_call_operand.vmem [shape: f32[1,128], index: 3, kind: input, shape index: {}]
  %s4 = inlined_call_operand.hbm [shape: f32[8,128], index: 4, kind: output, shape index: {}]
  %s5 = sld [smem:[#allocation0]]
  $region42: #{tpu_custom_call.1} parent=0
    _
  %s7 = ssub.s32 1, %s5
  %s8 = scalar_select 0, %s7, %s5
  $region1: #{tpu_custom_call.1} parent=0
    #allocation3 [shape = 'u8[4096]{0}', space=vmem, size = 0x1000, scoped, tag = 'input window, operand 0, single buffered']
    #allocation4 [shape = 's32[1]{0}', space=sflag, size = 0x4, scoped, tag = 'scoped memory for tpu_custom_call.1']
    #allocation5 [shape = 's32[1]{0}', space=sflag, size = 0x4, scoped, tag = 'scoped memory for tpu_custom_call.1']
    #allocation6 [shape = 'u8[16384]{0}', space=vmem, size = 0x4000, scoped, tag = 'input window, operand 1, single buffered']
    #allocation7 [shape = 's32[1]{0}', space=sflag, size = 0x4, scoped, tag = 'scoped memory for tpu_custom_call.1']
    #allocation8 [shape = 'u8[4096]{0}', space=vmem, size = 0x1000, scoped, tag = 'output window, operand 0, single buffered']
    %9 = vsyncpa [#allocation4], 0
    %10 = vsyncpa [#allocation7], 0
    %11 = vsyncpa [#allocation5], 0
    // Predicated region
    $region2: #{tpu_custom_call.1} parent=1 // pred_check
      _
    $region3: #{tpu_custom_call.1} parent=1 // pred_check_branch
      %13 = sbr.rel (0) target = $region5
    $region4: #{tpu_custom_call.1} parent=1 // pred_region
      %s15 = ssub.s32 128, 128
      %16 = vsyncadd [#allocation4], %s15
      %s18 = sshll.u32 [#allocation3], 4
      %s19 = int_to_ptr.vmem [resolvable:$true] %s18
      %21 = dma.hbm_to_vmem [thread:$0]  %s0, 128, %s19, [#allocation4]
    $region5: #{tpu_custom_call.1} parent=1 // pred_fallthru
      _
    // Predicated region
    $region6: #{tpu_custom_call.1} parent=1 // pred_check
      _
    $region7: #{tpu_custom_call.1} parent=1 // pred_check_branch
      %23 = sbr.rel (0) target = $region9
    $region8: #{tpu_custom_call.1} parent=1 // pred_region
      %s25 = ssub.s32 512, 512
      %26 = vsyncadd [#allocation7], %s25
      %s27 = sshll.u32 [#allocation6], 4
      %s28 = int_to_ptr.vmem [resolvable:$true] %s27
      %33 = dma.hbm_to_vmem [thread:$0]  %s1, 512, %s28, [#allocation7], 128, 128, 8
    $region9: #{tpu_custom_call.1} parent=1 // pred_fallthru
      _
    // Predicated region
    $region10: #{tpu_custom_call.1} parent=1 // pred_check
      _
    $region11: #{tpu_custom_call.1} parent=1 // pred_check_branch
      %35 = sbr.rel (0) target = $region13
    $region12: #{tpu_custom_call.1} parent=1 // pred_region
      _
    $region13: #{tpu_custom_call.1} parent=1 // pred_fallthru
      _
    // Predicated region
    $region14: #{tpu_custom_call.1} parent=1 // pred_check
      _
    $region15: #{tpu_custom_call.1} parent=1 // pred_check_branch
      %37 = sbr.rel (0) target = $region17
    $region16: #{tpu_custom_call.1} parent=1 // pred_region
      _
    $region17: #{tpu_custom_call.1} parent=1 // pred_fallthru
      _
    // Predicated region
    $region18: #{tpu_custom_call.1} parent=1 // pred_check
      _
    $region19: #{tpu_custom_call.1} parent=1 // pred_check_branch
      %39 = sbr.rel (0) target = $region21
    $region20: #{tpu_custom_call.1} parent=1 // pred_region
      %40 = dma.done [#allocation4], 128
    $region21: #{tpu_custom_call.1} parent=1 // pred_fallthru
      _
    // Predicated region
    $region22: #{tpu_custom_call.1} parent=1 // pred_check
      _
    $region23: #{tpu_custom_call.1} parent=1 // pred_check_branch
      %42 = sbr.rel (0) target = $region25
    $region24: #{tpu_custom_call.1} parent=1 // pred_region
      %43 = dma.done [#allocation7], 512
    $region25: #{tpu_custom_call.1} parent=1 // pred_fallthru
      _
    %p44 = scmp.eq.s32.totalorder 0, 0
    // Predicated region
    $region26: #{tpu_custom_call.1} parent=1 // pred_check
      %p45 = pneg %p44
    $region27: #{tpu_custom_call.1} parent=1 // pred_check_branch
      %47 = sbr.rel (%p45) target = $region29
    $region28: #{tpu_custom_call.1} parent=1 // pred_region
      %48 = vst [vmem:[#allocation2] sm:$0xff] 0.0
    $region29: #{tpu_custom_call.1} parent=1 // pred_fallthru
      _
    %v49 = vld [vmem:[#allocation2] sm:$0xff]
    %v50 = vld [vmem:[#allocation3] sm:$0xff]
    %v51 = vld [vmem:[#allocation6] sm:$0xff]
    %v52 = vld [vmem:[#allocation6 + $0x8] sm:$0xff]
    %v53 = vld [vmem:[#allocation6 + $0x10] sm:$0xff]
    %v54 = vld [vmem:[#allocation6 + $0x18] sm:$0xff]
    %vm55 = vcmask 261120
    %v57 = vsel %vm55, %v50, 0
    %59 = vmatprep.subr.mxu0 0.0
    %60 = vmatpush1.msra.mxu0 %v51
    %61 = vmatprep.subr.mxu0 0.0
    %62 = vmatpush1.msra.mxu0 %v52
    %63 = vmatprep.subr.mxu0 0.0
    %64 = vmatpush1.msra.mxu0 %v53
    %65 = vmatprep.subr.mxu0 0.0
    %66 = vmatpush1.msra.mxu0 %v54
    %67 = vmatprep.subr.mxu0 0.0
    %68 = vmatpush1.msra.mxu0 0.0
    %69 = vmatprep.subr.mxu0 0.0
    %70 = vmatpush1.msra.mxu0 0.0
    %71 = vmatprep.subr.mxu0 0.0
    %72 = vmatpush1.msra.mxu0 0.0
    %73 = vmatprep.subr.mxu0 0.0
    %74 = vmatpush1.msra.mxu0 0.0
    %75 = vmatprep.subr.mxu0 0.0
    %76 = vmatpush1.msra.mxu0 0.0
    %77 = vmatprep.subr.mxu0 0.0
    %78 = vmatpush1.msra.mxu0 0.0
    %79 = vmatprep.subr.mxu0 0.0
    %80 = vmatpush1.msra.mxu0 0.0
    %81 = vmatprep.subr.mxu0 0.0
    %82 = vmatpush1.msra.mxu0 0.0
    %83 = vmatprep.subr.mxu0 0.0
    %84 = vmatpush1.msra.mxu0 0.0
    %85 = vmatprep.subr.mxu0 0.0
    %86 = vmatpush1.msra.mxu0 0.0
    %87 = vmatprep.subr.mxu0 0.0
    %88 = vmatpush1.msra.mxu0 0.0
    %89 = vmatprep.subr.mxu0 0.0
    %90 = vmatpush1.msra.mxu0 0.0
    %91 = vmatprep.subr.mxu0 0.0
    %92 = vmatpush1.msra.mxu0 0.0
    %93 = vmatprep.subr.mxu0 0.0
    %94 = vmatpush1.msra.mxu0 0.0
    %95 = vmatprep.subr.mxu0 0.0
    %96 = vmatpush1.msra.mxu0 0.0
    %97 = vmatprep.subr.mxu0 0.0
    %98 = vmatpush1.msra.mxu0 0.0
    %99 = vmatprep.subr.mxu0 0.0
    %100 = vmatpush1.msra.mxu0 0.0
    %101 = vmatprep.subr.mxu0 0.0
    %102 = vmatpush1.msra.mxu0 0.0
    %103 = vmatprep.subr.mxu0 0.0
    %104 = vmatpush1.msra.mxu0 0.0
    %105 = vmatprep.subr.mxu0 0.0
    %106 = vmatpush1.msra.mxu0 0.0
    %107 = vmatprep.subr.mxu0 0.0
    %108 = vmatpush1.msra.mxu0 0.0
    %109 = vmatprep.subr.mxu0 0.0
    %110 = vmatpush1.msra.mxu0 0.0
    %111 = vmatprep.subr.mxu0 0.0
    %112 = vmatpush1.msra.mxu0 0.0
    %113 = vmatprep.subr.mxu0 0.0
    %114 = vmatpush1.msra.mxu0 0.0
    %115 = vmatprep.subr.mxu0 0.0
    %116 = vmatpush1.msra.mxu0 0.0
    %117 = vmatprep.subr.mxu0 0.0
    %118 = vmatpush1.msra.mxu0 0.0
    %119 = vmatprep.subr.mxu0 0.0
    %120 = vmatpush1.msra.mxu0 0.0
    %121 = vmatprep.subr.mxu0 0.0
    %122 = vmatpush1.msra.mxu0 0.0
    %123 = vmatprep.mubr.f32.mxu0 0.0
    %124 = vmatmul.mubr.f32.gmra.mrb[0].mxu0 %v57
    %v125 = vpop.f32.mrb[0].mxu0
    %v126 = vadd.f32 0.0, %v125
    %v127 = vpop.f32.mrb[0].mxu0
    %128 = vdwg.mxu0
    %v129 = vadd.f32 %v49, %v126
    %130 = vst [vmem:[#allocation2] sm:$0xff] %v129
    // Predicated region
    $region30: #{tpu_custom_call.1} parent=1 // pred_check
      %p131 = pneg %p44
    $region31: #{tpu_custom_call.1} parent=1 // pred_check_branch
      %133 = sbr.rel (%p131) target = $region33
    $region32: #{tpu_custom_call.1} parent=1 // pred_region
      %v134 = vld [vmem:[#allocation2] sm:$0xff]
      %v135 = vrot.slane %v134, 4
      %v136 = vadd.f32 %v134, %v135
      %v137 = vrot.slane %v136, 2
      %v138 = vadd.f32 %v136, %v137
      %v139 = vrot.slane %v138, 1
      %v140 = vadd.f32 %v138, %v139
      %v141 = vmul.f32 %v140, 0.125
      %v142 = vsub.f32 %v134, %v141
      %v143 = vmul.f32 %v142, %v142
      %v144 = vrot.slane %v143, 4
      %v145 = vadd.f32 %v143, %v144
      %v146 = vrot.slane %v145, 2
      %v147 = vadd.f32 %v145, %v146
      %v148 = vrot.slane %v147, 1
      %v149 = vadd.f32 %v147, %v148
      %v150 = vmul.f32 %v149, 0.125
      %v151 = vadd.f32 %v150, 1e-05
      %v152 = vrsqrt.pop %v151
      %v153 = vld [vmem:[%s2] sm:$0x1]
      %v154 = vmul.f32 %v152, %v153
      %v155 = vlaneseq
      %v156 = vshrl.u32 %v155, 7
      %v157 = vsub.s32 0, %v156
      %v158 = vrot.slane %v154, %v157
      %v159 = vmul.f32 %v142, %v158
      %v160 = vld [vmem:[%s3] sm:$0x1]
      %v162 = vlaneseq
      %v163 = vshrl.u32 %v162, 7
      %v164 = vsub.s32 0, %v163
      %v165 = vrot.slane %v160, %v164
      %v167 = vadd.f32 %v159, %v165
      %v168 = vmax.f32 %v167, 0.0
      %169 = vst [vmem:[#allocation8] sm:$0xff] %v168
    $region33: #{tpu_custom_call.1} parent=1 // pred_fallthru
      _
    // Predicated region
    $region34: #{tpu_custom_call.1} parent=1 // pred_check
      _
    $region35: #{tpu_custom_call.1} parent=1 // pred_check_branch
      %171 = sbr.rel (0) target = $region37
    $region36: #{tpu_custom_call.1} parent=1 // pred_region
      %s173 = ssub.s32 128, 128
      %174 = vsyncadd [#allocation5], %s173
      %s176 = sshll.u32 [#allocation8], 4
      %s177 = int_to_ptr.vmem [resolvable:$true] %s176
      %179 = dma.vmem_to_hbm [thread:$0]  %s177, 128, %s4, [#allocation5]
    $region37: #{tpu_custom_call.1} parent=1 // pred_fallthru
      _
    // Predicated region
    $region38: #{tpu_custom_call.1} parent=1 // pred_check
      _
    $region39: #{tpu_custom_call.1} parent=1 // pred_check_branch
      %181 = sbr.rel (0) target = $region41
    $region40: #{tpu_custom_call.1} parent=1 // pred_region
      %182 = dma.done [#allocation5], 128
    $region41: #{tpu_custom_call.1} parent=1 // pred_fallthru
      _
    %183 = vsyncpa [#allocation4], 1
    %184 = vsyncpa [#allocation7], 1
    %185 = vsyncpa [#allocation5], 1

</llo_original>
